<compile_context>
chip_gen: v5e
topology: v5e:2x2
jax: 0.10.0
libtpu: 0.0.40
codegen_flags: <defaults>
</compile_context>

<pallas_src>
import functools

import jax
import jax.numpy as jnp
from jax.experimental import pallas as pl
from jax.experimental.pallas import tpu as pltpu


def _dgm_kernel(tx_ref, wtx_ref, ball_ref, wsg_ref, wsh_ref, wo_ref, bo_ref,
                out_ref):
    """One batch-tile (feature-major) of the full Net_DGM forward pass.

    tx_ref  : (dim_in, BB)           concatenated [t, x], transposed
    wtx_ref : (13*dim_S, dim_in)     fused tx-side weights:
                                       rows [0:dim_S)              input layer
                                       rows [dim_S + 4*l*dim_S:..) layer l gates (Z|G|R|H)
    ball_ref: (13*dim_S, 1)          fused biases (same row layout)
    wsg_ref : (3, 3*dim_S, dim_S)    per-layer fused S-side gate weights (Z|G|R)
    wsh_ref : (3, dim_S, dim_S)      per-layer gate-H weight (applied to S*R)
    wo_ref  : (dim_S, 1)             output layer weight (column)
    bo_ref  : (1, 1)                 output layer bias
    out_ref : (1, BB)                lane-dense output row
    """
    dim_S = wsh_ref.shape[-1]
    tx = tx_ref[...]                                              # (dim_in, BB)

    # One MXU push covers the input layer AND every gate's tx contribution,
    # biases included.  tx is dead after this.
    txp = (jnp.dot(wtx_ref[...], tx, preferred_element_type=jnp.float32)
           + ball_ref[...])                                       # (13*dim_S, BB)

    # input_layer: Tanh(Linear(tx))
    S = jnp.tanh(txp[:dim_S, :])                                  # (dim_S, BB)

    # 3 DGM layers, statically unrolled; gate row order per layer: (Z, G, R, H)
    for layer in range(3):
        base = dim_S + layer * 4 * dim_S
        pre_zgr = txp[base: base + 3 * dim_S, :]                  # (3*dim_S, BB)
        pre_h = txp[base + 3 * dim_S: base + 4 * dim_S, :]        # (dim_S,   BB)

        # Z, G, R share the same S input -> one fused matmul + one fused tanh.
        zgr = jnp.tanh(
            pre_zgr
            + jnp.dot(wsg_ref[layer], S, preferred_element_type=jnp.float32))
        Z = zgr[0 * dim_S:1 * dim_S, :]                           # free sublane views
        G = zgr[1 * dim_S:2 * dim_S, :]
        R = zgr[2 * dim_S:3 * dim_S, :]

        # H uses S*R, so it needs its own matmul + tanh.
        H = jnp.tanh(
            pre_h
            + jnp.dot(wsh_ref[layer], S * R,
                      preferred_element_type=jnp.float32))

        S = (1.0 - G) * H + Z * S

    # output_layer: Linear(dim_S -> 1) as multiply + sublane reduction
    # -> lane-dense (1, BB) row store.
    out_ref[...] = (jnp.sum(S * wo_ref[...], axis=0, keepdims=True)
                    + bo_ref[...])


def net_dgm_forward(t, x, params, *, block_b=512):
    """Pallas forward pass of Net_DGM.  t: (B,1), x: (B,dim_x) -> (B,1)."""
    # Concatenate and go feature-major (batch on the lane axis).
    tx = jnp.concatenate([t, x], axis=1).astype(jnp.float32).T    # (dim_in, B)
    dim_in, B = tx.shape

    # Don't over-pad tiny batches; keep the tile a multiple of 128 lanes.
    block_b = min(block_b, max(128, pl.cdiv(B, 128) * 128))
    n_blocks = pl.cdiv(B, block_b)
    B_pad = n_blocks * block_b
    if B_pad != B:
        tx = jnp.pad(tx, ((0, 0), (0, B_pad - B)))

    full = lambda shape: pl.BlockSpec(shape, lambda i, _s=shape: (0,) * len(_s))

    out = pl.pallas_call(
        _dgm_kernel,
        out_shape=jax.ShapeDtypeStruct((1, B_pad), jnp.float32),
        grid_spec=pltpu.PrefetchScalarGridSpec(
            num_scalar_prefetch=0,
            grid=(n_blocks,),
            in_specs=[
                pl.BlockSpec((dim_in, block_b), lambda i: (0, i)),  # tx (lane-tiled)
                full(params["wtx"].shape),                          # fused tx weights
                full(params["ball"].shape),                         # fused biases
                full(params["wsg"].shape),                          # S-side (Z|G|R)
                full(params["wsh"].shape),                          # S*R side (H)
                full(params["wo"].shape),                           # output weight
                full(params["bo"].shape),                           # output bias
            ],
            out_specs=pl.BlockSpec((1, block_b), lambda i: (0, i)),
        ),
        compiler_params=pltpu.CompilerParams(
            dimension_semantics=("parallel",)),
    )(tx, params["wtx"], params["ball"], params["wsg"], params["wsh"],
      params["wo"], params["bo"])

    return out[0, :B, None]                                        # back to (B, 1)


def init_params(key, dim_x, dim_S):
    """PyTorch-Linear-style init (uniform +-1/sqrt(fan_in)), stored directly in
    the fused, feature-major (transposed) kernel layout."""
    dim_in = dim_x + 1
    ks = list(jax.random.split(key, 8))

    def unif(k, shape, fan_in):
        bound = 1.0 / jnp.sqrt(float(fan_in))
        return jax.random.uniform(k, shape, jnp.float32, -bound, bound)

    fan_gate = dim_in + dim_S  # fan-in of the cat([x, S]) gate Linears

    wi = unif(ks[0], (dim_S, dim_in), dim_in)            # input layer W^T
    bi = unif(ks[1], (dim_S, 1), dim_in)
    wxg = unif(ks[2], (3, 4 * dim_S, dim_in), fan_gate)  # gate tx weights (Z|G|R|H), W^T
    bg = unif(ks[3], (3, 4 * dim_S, 1), fan_gate)        # gate biases     (Z|G|R|H)
    wsg = unif(ks[4], (3, 3 * dim_S, dim_S), fan_gate)   # gate S weights  (Z|G|R),  W^T
    wsh = unif(ks[5], (3, dim_S, dim_S), fan_gate)       # gate-H weight on S*R,     W^T
    wo = unif(ks[6], (dim_S, 1), dim_S)                  # output weight (column)
    bo = unif(ks[7], (1, 1), dim_S)

    # Fuse all tx-side projections + biases into one stacked weight / bias.
    wtx = jnp.concatenate([wi, wxg.reshape(3 * 4 * dim_S, dim_in)], axis=0)
    ball = jnp.concatenate([bi, bg.reshape(3 * 4 * dim_S, 1)], axis=0)

    return dict(wtx=wtx, ball=ball, wsg=wsg, wsh=wsh, wo=wo, bo=bo)


def net_dgm_reference(t, x, p):
    """Pure-JAX reference of the same forward pass (for verification)."""
    tx = jnp.concatenate([t, x], axis=1).astype(jnp.float32)       # (B, dim_in)
    dim_S = p["wsh"].shape[-1]
    txp = tx @ p["wtx"].T + p["ball"].T                            # (B, 13*dim_S)
    S = jnp.tanh(txp[:, :dim_S])
    for l in range(3):
        base = dim_S + l * 4 * dim_S
        pre_zgr = txp[:, base:base + 3 * dim_S]
        pre_h = txp[:, base + 3 * dim_S:base + 4 * dim_S]
        zgr = jnp.tanh(pre_zgr + S @ p["wsg"][l].T)
        Z = zgr[:, 0 * dim_S:1 * dim_S]
        G = zgr[:, 1 * dim_S:2 * dim_S]
        R = zgr[:, 2 * dim_S:3 * dim_S]
        H = jnp.tanh(pre_h + (S * R) @ p["wsh"][l].T)
        S = (1.0 - G) * H + Z * S
    return S @ p["wo"] + p["bo"]


if __name__ == "__main__":
    dim_x, dim_S, B = 4, 32, 16

    key = jax.random.PRNGKey(0)
    kp, kt, kx = jax.random.split(key, 3)
    params = init_params(kp, dim_x, dim_S)
    t = jax.random.normal(kt, (B, 1), jnp.float32)
    x = jax.random.normal(kx, (B, dim_x), jnp.float32)

    out = jax.jit(functools.partial(net_dgm_forward, block_b=512))(t, x, params)
    out = jax.block_until_ready(out)

    ref = net_dgm_reference(t, x, params)
    assert out.shape == (B, 1)
    assert jnp.allclose(out, ref, atol=1e-5, rtol=1e-5), "mismatch vs reference"
    print("KERNEL_OK")
</pallas_src>

<mosaic_0001>
module attributes {stable_mosaic.version = 11 : i64} {
  func.func @_dgm_kernel(%arg0: i32, %arg1: memref<5x128xf32, #tpu.memory_space<vmem>>, %arg2: memref<416x5xf32, #tpu.memory_space<vmem>>, %arg3: memref<416x1xf32, #tpu.memory_space<vmem>>, %arg4: memref<3x96x32xf32, #tpu.memory_space<vmem>>, %arg5: memref<3x32x32xf32, #tpu.memory_space<vmem>>, %arg6: memref<32x1xf32, #tpu.memory_space<vmem>>, %arg7: memref<1x1xf32, #tpu.memory_space<vmem>>, %arg8: memref<1x128xf32, #tpu.memory_space<vmem>>) attributes {dimension_semantics = [#tpu.dimension_semantics<parallel>], iteration_bounds = array<i64: 1>, scalar_prefetch = 0 : i64, scratch_operands = 0 : i64, tpu.core_type = #tpu.core_type<tc>, window_params = [{transform_indices = @transform_0, window_bounds = array<i64: 5, 128>}, {pipeline_mode = #tpu.pipeline_mode<synchronous>, transform_indices = @transform_1, window_bounds = array<i64: 416, 5>}, {pipeline_mode = #tpu.pipeline_mode<synchronous>, transform_indices = @transform_2, window_bounds = array<i64: 416, 1>}, {pipeline_mode = #tpu.pipeline_mode<synchronous>, transform_indices = @transform_3, window_bounds = array<i64: 3, 96, 32>}, {pipeline_mode = #tpu.pipeline_mode<synchronous>, transform_indices = @transform_4, window_bounds = array<i64: 3, 32, 32>}, {pipeline_mode = #tpu.pipeline_mode<synchronous>, transform_indices = @transform_5, window_bounds = array<i64: 32, 1>}, {pipeline_mode = #tpu.pipeline_mode<synchronous>, transform_indices = @transform_6, window_bounds = array<i64: 1, 1>}, {transform_indices = @transform_7, window_bounds = array<i64: 1, 128>}]} {
    %c0 = arith.constant 0 : index
    %c0_0 = arith.constant 0 : index
    %0 = vector.load %arg1[%c0, %c0_0] : memref<5x128xf32, #tpu.memory_space<vmem>>, vector<5x128xf32>
    %c0_1 = arith.constant 0 : index
    %c0_2 = arith.constant 0 : index
    %1 = vector.load %arg2[%c0_1, %c0_2] : memref<416x5xf32, #tpu.memory_space<vmem>>, vector<416x5xf32>
    %cst = arith.constant dense<0.000000e+00> : vector<416x128xf32>
    %2 = tpu.matmul %1, %0, %cst {dimension_numbers = #tpu.dot_dimension_numbers<[1], [0], [0], [1], [0, 0, 1, 1], [], []>} : vector<416x5xf32>, vector<5x128xf32>, vector<416x128xf32> -> vector<416x128xf32>
    %c0_3 = arith.constant 0 : index
    %c0_4 = arith.constant 0 : index
    %3 = vector.load %arg3[%c0_3, %c0_4] : memref<416x1xf32, #tpu.memory_space<vmem>>, vector<416x1xf32>
    %4 = vector.broadcast %3 : vector<416x1xf32> to vector<416x128xf32>
    %5 = arith.addf %2, %4 : vector<416x128xf32>
    %6 = vector.extract_strided_slice %5 {offsets = [0, 0], sizes = [32, 128], strides = [1, 1]} : vector<416x128xf32> to vector<32x128xf32>
    %7 = math.tanh %6 : vector<32x128xf32>
    %8 = vector.extract_strided_slice %5 {offsets = [32, 0], sizes = [96, 128], strides = [1, 1]} : vector<416x128xf32> to vector<96x128xf32>
    %9 = vector.extract_strided_slice %5 {offsets = [128, 0], sizes = [32, 128], strides = [1, 1]} : vector<416x128xf32> to vector<32x128xf32>
    %c0_5 = arith.constant 0 : index
    %c0_6 = arith.constant 0 : index
    %c0_7 = arith.constant 0 : index
    %10 = vector.load %arg4[%c0_5, %c0_6, %c0_7] : memref<3x96x32xf32, #tpu.memory_space<vmem>>, vector<1x96x32xf32>
    %11 = vector.shape_cast %10 : vector<1x96x32xf32> to vector<96x32xf32>
    %cst_8 = arith.constant dense<0.000000e+00> : vector<96x128xf32>
    %12 = tpu.matmul %11, %7, %cst_8 {dimension_numbers = #tpu.dot_dimension_numbers<[1], [0], [0], [1], [0, 0, 1, 1], [], []>} : vector<96x32xf32>, vector<32x128xf32>, vector<96x128xf32> -> vector<96x128xf32>
    %13 = arith.addf %8, %12 : vector<96x128xf32>
    %14 = math.tanh %13 : vector<96x128xf32>
    %15 = vector.extract_strided_slice %14 {offsets = [0, 0], sizes = [32, 128], strides = [1, 1]} : vector<96x128xf32> to vector<32x128xf32>
    %16 = vector.extract_strided_slice %14 {offsets = [32, 0], sizes = [32, 128], strides = [1, 1]} : vector<96x128xf32> to vector<32x128xf32>
    %17 = vector.extract_strided_slice %14 {offsets = [64, 0], sizes = [32, 128], strides = [1, 1]} : vector<96x128xf32> to vector<32x128xf32>
    %c0_9 = arith.constant 0 : index
    %c0_10 = arith.constant 0 : index
    %c0_11 = arith.constant 0 : index
    %18 = vector.load %arg5[%c0_9, %c0_10, %c0_11] : memref<3x32x32xf32, #tpu.memory_space<vmem>>, vector<1x32x32xf32>
    %19 = vector.shape_cast %18 : vector<1x32x32xf32> to vector<32x32xf32>
    %20 = arith.mulf %7, %17 : vector<32x128xf32>
    %cst_12 = arith.constant dense<0.000000e+00> : vector<32x128xf32>
    %21 = tpu.matmul %19, %20, %cst_12 {dimension_numbers = #tpu.dot_dimension_numbers<[1], [0], [0], [1], [0, 0, 1, 1], [], []>} : vector<32x32xf32>, vector<32x128xf32>, vector<32x128xf32> -> vector<32x128xf32>
    %22 = arith.addf %9, %21 : vector<32x128xf32>
    %23 = math.tanh %22 : vector<32x128xf32>
    %cst_13 = arith.constant 1.000000e+00 : f32
    %24 = vector.broadcast %cst_13 : f32 to vector<32x128xf32>
    %25 = arith.subf %24, %16 : vector<32x128xf32>
    %26 = arith.mulf %25, %23 : vector<32x128xf32>
    %27 = arith.mulf %15, %7 : vector<32x128xf32>
    %28 = arith.addf %26, %27 : vector<32x128xf32>
    %29 = vector.extract_strided_slice %5 {offsets = [160, 0], sizes = [96, 128], strides = [1, 1]} : vector<416x128xf32> to vector<96x128xf32>
    %30 = vector.extract_strided_slice %5 {offsets = [256, 0], sizes = [32, 128], strides = [1, 1]} : vector<416x128xf32> to vector<32x128xf32>
    %c1 = arith.constant 1 : index
    %c0_14 = arith.constant 0 : index
    %c0_15 = arith.constant 0 : index
    %31 = vector.load %arg4[%c1, %c0_14, %c0_15] : memref<3x96x32xf32, #tpu.memory_space<vmem>>, vector<1x96x32xf32>
    %32 = vector.shape_cast %31 : vector<1x96x32xf32> to vector<96x32xf32>
    %cst_16 = arith.constant dense<0.000000e+00> : vector<96x128xf32>
    %33 = tpu.matmul %32, %28, %cst_16 {dimension_numbers = #tpu.dot_dimension_numbers<[1], [0], [0], [1], [0, 0, 1, 1], [], []>} : vector<96x32xf32>, vector<32x128xf32>, vector<96x128xf32> -> vector<96x128xf32>
    %34 = arith.addf %29, %33 : vector<96x128xf32>
    %35 = math.tanh %34 : vector<96x128xf32>
    %36 = vector.extract_strided_slice %35 {offsets = [0, 0], sizes = [32, 128], strides = [1, 1]} : vector<96x128xf32> to vector<32x128xf32>
    %37 = vector.extract_strided_slice %35 {offsets = [32, 0], sizes = [32, 128], strides = [1, 1]} : vector<96x128xf32> to vector<32x128xf32>
    %38 = vector.extract_strided_slice %35 {offsets = [64, 0], sizes = [32, 128], strides = [1, 1]} : vector<96x128xf32> to vector<32x128xf32>
    %c1_17 = arith.constant 1 : index
    %c0_18 = arith.constant 0 : index
    %c0_19 = arith.constant 0 : index
    %39 = vector.load %arg5[%c1_17, %c0_18, %c0_19] : memref<3x32x32xf32, #tpu.memory_space<vmem>>, vector<1x32x32xf32>
    %40 = vector.shape_cast %39 : vector<1x32x32xf32> to vector<32x32xf32>
    %41 = arith.mulf %28, %38 : vector<32x128xf32>
    %cst_20 = arith.constant dense<0.000000e+00> : vector<32x128xf32>
    %42 = tpu.matmul %40, %41, %cst_20 {dimension_numbers = #tpu.dot_dimension_numbers<[1], [0], [0], [1], [0, 0, 1, 1], [], []>} : vector<32x32xf32>, vector<32x128xf32>, vector<32x128xf32> -> vector<32x128xf32>
    %43 = arith.addf %30, %42 : vector<32x128xf32>
    %44 = math.tanh %43 : vector<32x128xf32>
    %cst_21 = arith.constant 1.000000e+00 : f32
    %45 = vector.broadcast %cst_21 : f32 to vector<32x128xf32>
    %46 = arith.subf %45, %37 : vector<32x128xf32>
    %47 = arith.mulf %46, %44 : vector<32x128xf32>
    %48 = arith.mulf %36, %28 : vector<32x128xf32>
    %49 = arith.addf %47, %48 : vector<32x128xf32>
    %50 = vector.extract_strided_slice %5 {offsets = [288, 0], sizes = [96, 128], strides = [1, 1]} : vector<416x128xf32> to vector<96x128xf32>
    %51 = vector.extract_strided_slice %5 {offsets = [384, 0], sizes = [32, 128], strides = [1, 1]} : vector<416x128xf32> to vector<32x128xf32>
    %c2 = arith.constant 2 : index
    %c0_22 = arith.constant 0 : index
    %c0_23 = arith.constant 0 : index
    %52 = vector.load %arg4[%c2, %c0_22, %c0_23] : memref<3x96x32xf32, #tpu.memory_space<vmem>>, vector<1x96x32xf32>
    %53 = vector.shape_cast %52 : vector<1x96x32xf32> to vector<96x32xf32>
    %cst_24 = arith.constant dense<0.000000e+00> : vector<96x128xf32>
    %54 = tpu.matmul %53, %49, %cst_24 {dimension_numbers = #tpu.dot_dimension_numbers<[1], [0], [0], [1], [0, 0, 1, 1], [], []>} : vector<96x32xf32>, vector<32x128xf32>, vector<96x128xf32> -> vector<96x128xf32>
    %55 = arith.addf %50, %54 : vector<96x128xf32>
    %56 = math.tanh %55 : vector<96x128xf32>
    %57 = vector.extract_strided_slice %56 {offsets = [0, 0], sizes = [32, 128], strides = [1, 1]} : vector<96x128xf32> to vector<32x128xf32>
    %58 = vector.extract_strided_slice %56 {offsets = [32, 0], sizes = [32, 128], strides = [1, 1]} : vector<96x128xf32> to vector<32x128xf32>
    %59 = vector.extract_strided_slice %56 {offsets = [64, 0], sizes = [32, 128], strides = [1, 1]} : vector<96x128xf32> to vector<32x128xf32>
    %c2_25 = arith.constant 2 : index
    %c0_26 = arith.constant 0 : index
    %c0_27 = arith.constant 0 : index
    %60 = vector.load %arg5[%c2_25, %c0_26, %c0_27] : memref<3x32x32xf32, #tpu.memory_space<vmem>>, vector<1x32x32xf32>
    %61 = vector.shape_cast %60 : vector<1x32x32xf32> to vector<32x32xf32>
    %62 = arith.mulf %49, %59 : vector<32x128xf32>
    %cst_28 = arith.constant dense<0.000000e+00> : vector<32x128xf32>
    %63 = tpu.matmul %61, %62, %cst_28 {dimension_numbers = #tpu.dot_dimension_numbers<[1], [0], [0], [1], [0, 0, 1, 1], [], []>} : vector<32x32xf32>, vector<32x128xf32>, vector<32x128xf32> -> vector<32x128xf32>
    %64 = arith.addf %51, %63 : vector<32x128xf32>
    %65 = math.tanh %64 : vector<32x128xf32>
    %cst_29 = arith.constant 1.000000e+00 : f32
    %66 = vector.broadcast %cst_29 : f32 to vector<32x128xf32>
    %67 = arith.subf %66, %58 : vector<32x128xf32>
    %68 = arith.mulf %67, %65 : vector<32x128xf32>
    %69 = arith.mulf %57, %49 : vector<32x128xf32>
    %70 = arith.addf %68, %69 : vector<32x128xf32>
    %c0_30 = arith.constant 0 : index
    %c0_31 = arith.constant 0 : index
    %71 = vector.load %arg6[%c0_30, %c0_31] : memref<32x1xf32, #tpu.memory_space<vmem>>, vector<32x1xf32>
    %72 = vector.broadcast %71 : vector<32x1xf32> to vector<32x128xf32>
    %73 = arith.mulf %70, %72 : vector<32x128xf32>
    %cst_32 = arith.constant dense<0.000000e+00> : vector<128xf32>
    %74 = vector.multi_reduction <add>, %73, %cst_32 [0] : vector<32x128xf32> to vector<128xf32>
    %75 = vector.shape_cast %74 : vector<128xf32> to vector<1x128xf32>
    %c0_33 = arith.constant 0 : index
    %c0_34 = arith.constant 0 : index
    %76 = vector.load %arg7[%c0_33, %c0_34] : memref<1x1xf32, #tpu.memory_space<vmem>>, vector<1x1xf32>
    %77 = vector.broadcast %76 : vector<1x1xf32> to vector<1x128xf32>
    %78 = arith.addf %75, %77 : vector<1x128xf32>
    %c0_35 = arith.constant 0 : index
    %c0_36 = arith.constant 0 : index
    %79 = vector.load %arg8[%c0_35, %c0_36] : memref<1x128xf32, #tpu.memory_space<vmem>>, vector<1x128xf32>
    tpu.vector_store %arg8[%c0_35, %c0_36], %78 {strides = array<i32>} : memref<1x128xf32, #tpu.memory_space<vmem>>, vector<1x128xf32>,
    return
  }
  func.func @transform_0(%arg0: i32) -> (i32, i32) {
    %c0_i32 = arith.constant 0 : i32
    %c0_i32_0 = arith.constant 0 : i32
    return %c0_i32, %arg0 : i32, i32
  }
  func.func @transform_1(%arg0: i32) -> (i32, i32) {
    %c0_i32 = arith.constant 0 : i32
    %c0_i32_0 = arith.constant 0 : i32
    %c0_i32_1 = arith.constant 0 : i32
    return %c0_i32, %c0_i32_0 : i32, i32
  }
  func.func @transform_2(%arg0: i32) -> (i32, i32) {
    %c0_i32 = arith.constant 0 : i32
    %c0_i32_0 = arith.constant 0 : i32
    %c0_i32_1 = arith.constant 0 : i32
    return %c0_i32, %c0_i32_0 : i32, i32
  }
  func.func @transform_3(%arg0: i32) -> (i32, i32, i32) {
    %c0_i32 = arith.constant 0 : i32
    %c0_i32_0 = arith.constant 0 : i32
    %c0_i32_1 = arith.constant 0 : i32
    %c0_i32_2 = arith.constant 0 : i32
    return %c0_i32, %c0_i32_0, %c0_i32_1 : i32, i32, i32
  }
  func.func @transform_4(%arg0: i32) -> (i32, i32, i32) {
    %c0_i32 = arith.constant 0 : i32
    %c0_i32_0 = arith.constant 0 : i32
    %c0_i32_1 = arith.constant 0 : i32
    %c0_i32_2 = arith.constant 0 : i32
    return %c0_i32, %c0_i32_0, %c0_i32_1 : i32, i32, i32
  }
  func.func @transform_5(%arg0: i32) -> (i32, i32) {
    %c0_i32 = arith.constant 0 : i32
    %c0_i32_0 = arith.constant 0 : i32
    %c0_i32_1 = arith.constant 0 : i32
    return %c0_i32, %c0_i32_0 : i32, i32
  }
  func.func @transform_6(%arg0: i32) -> (i32, i32) {
    %c0_i32 = arith.constant 0 : i32
    %c0_i32_0 = arith.constant 0 : i32
    %c0_i32_1 = arith.constant 0 : i32
    return %c0_i32, %c0_i32_0 : i32, i32
  }
  func.func @transform_7(%arg0: i32) -> (i32, i32) {
    %c0_i32 = arith.constant 0 : i32
    %c0_i32_0 = arith.constant 0 : i32
    return %c0_i32, %arg0 : i32, i32
  }
}

</mosaic_0001>

<llo_original>
// kernel: net_dgm_forward.1
$region0: #{net_dgm_forward.1}
  #allocation0 [shape = 'u32[]', space=smem, size = 0x4, offset = 0x4, fixed_abs, tag = 'smem constant byte address 0x4 - core index']
  #allocation1 [shape = 'u32[72,128]{1,0:T(1,128)}', space=vmem, size = 0x9000, scoped, tag = 'internal scratch']
  #allocation2 [shape = 'f32[1,1]{1,0:T(1,128)S(1)}', space=vmem, size = 0x200, scoped, tag = 'scoped memory for net_dgm_forward.1']
  %s0 = inlined_call_operand.vmem [shape: f32[5,128], index: 0, kind: input, shape index: {}]
  %s1 = inlined_call_operand.vmem [shape: f32[416,5], index: 1, kind: input, shape index: {}]
  %s2 = inlined_call_operand.vmem [shape: f32[416,1], index: 2, kind: input, shape index: {}]
  %s3 = inlined_call_operand.vmem [shape: f32[3,96,32], index: 3, kind: input, shape index: {}]
  %s4 = inlined_call_operand.vmem [shape: f32[3,32,32], index: 4, kind: input, shape index: {}]
  %s5 = inlined_call_operand.vmem [shape: f32[32,1], index: 5, kind: input, shape index: {}]
  %s6 = inlined_call_operand.<no memory space> [shape: f32[1,1], index: 6, kind: input, shape index: {}]
  %s7 = inlined_call_operand.vmem [shape: f32[1,128], index: 7, kind: output, shape index: {}]
  %s8 = sld [smem:[#allocation0]]
  $region38: #{net_dgm_forward.1} parent=0
    _
  %s10 = ssub.s32 1, %s8
  %s11 = scalar_select 0, %s10, %s8
  %v12 = vstv %s6
  %13 = vst [vmem:[#allocation2] sm:$0x1] %v12
  // Predicated region
  $region2: #{net_dgm_forward.1} parent=0 // pred_check
    _
  $region3: #{net_dgm_forward.1} parent=0 // pred_check_branch
    %15 = sbr.rel (0) target = $region5
  $region4: #{net_dgm_forward.1} parent=0 // pred_region
    _
  $region5: #{net_dgm_forward.1} parent=0 // pred_fallthru
    _
  // Predicated region
  $region6: #{net_dgm_forward.1} parent=0 // pred_check
    _
  $region7: #{net_dgm_forward.1} parent=0 // pred_check_branch
    %17 = sbr.rel (0) target = $region9
  $region8: #{net_dgm_forward.1} parent=0 // pred_region
    _
  $region9: #{net_dgm_forward.1} parent=0 // pred_fallthru
    _
  // Predicated region
  $region10: #{net_dgm_forward.1} parent=0 // pred_check
    _
  $region11: #{net_dgm_forward.1} parent=0 // pred_check_branch
    %19 = sbr.rel (0) target = $region13
  $region12: #{net_dgm_forward.1} parent=0 // pred_region
    _
  $region13: #{net_dgm_forward.1} parent=0 // pred_fallthru
    _
  // Predicated region
  $region14: #{net_dgm_forward.1} parent=0 // pred_check
    _
  $region15: #{net_dgm_forward.1} parent=0 // pred_check_branch
    %21 = sbr.rel (0) target = $region17
  $region16: #{net_dgm_forward.1} parent=0 // pred_region
    _
  $region17: #{net_dgm_forward.1} parent=0 // pred_fallthru
    _
  // Predicated region
  $region18: #{net_dgm_forward.1} parent=0 // pred_check
    _
  $region19: #{net_dgm_forward.1} parent=0 // pred_check_branch
    %23 = sbr.rel (0) target = $region21
  $region20: #{net_dgm_forward.1} parent=0 // pred_region
    _
  $region21: #{net_dgm_forward.1} parent=0 // pred_fallthru
    _
  // Predicated region
  $region22: #{net_dgm_forward.1} parent=0 // pred_check
    _
  $region23: #{net_dgm_forward.1} parent=0 // pred_check_branch
    %25 = sbr.rel (0) target = $region25
  $region24: #{net_dgm_forward.1} parent=0 // pred_region
    _
  $region25: #{net_dgm_forward.1} parent=0 // pred_fallthru
    _
  // Predicated region
  $region26: #{net_dgm_forward.1} parent=0 // pred_check
    _
  $region27: #{net_dgm_forward.1} parent=0 // pred_check_branch
    %27 = sbr.rel (0) target = $region29
  $region28: #{net_dgm_forward.1} parent=0 // pred_region
    _
  $region29: #{net_dgm_forward.1} parent=0 // pred_fallthru
    _
  %v28 = vld [vmem:[%s0] sm:$0x1f]
  %v29 = vld [vmem:[%s1] sm:$0xff]
  %v30 = vld [vmem:[%s1 + $0x8] sm:$0xff]
  %v31 = vld [vmem:[%s1 + $0x10] sm:$0xff]
  %v32 = vld [vmem:[%s1 + $0x18] sm:$0xff]
  %v33 = vld [vmem:[%s1 + $0x20] sm:$0xff]
  %v34 = vld [vmem:[%s1 + $0x28] sm:$0xff]
  %v35 = vld [vmem:[%s1 + $0x30] sm:$0xff]
  %v36 = vld [vmem:[%s1 + $0x38] sm:$0xff]
  %v37 = vld [vmem:[%s1 + $0x40] sm:$0xff]
  %v38 = vld [vmem:[%s1 + $0x48] sm:$0xff]
  %v39 = vld [vmem:[%s1 + $0x50] sm:$0xff]
  %v40 = vld [vmem:[%s1 + $0x58] sm:$0xff]
  %v41 = vld [vmem:[%s1 + $0x60] sm:$0xff]
  %v42 = vld [vmem:[%s1 + $0x68] sm:$0xff]
  %v43 = vld [vmem:[%s1 + $0x70] sm:$0xff]
  %v44 = vld [vmem:[%s1 + $0x78] sm:$0xff]
  %v45 = vld [vmem:[%s1 + $0x80] sm:$0xff]
  %v46 = vld [vmem:[%s1 + $0x88] sm:$0xff]
  %v47 = vld [vmem:[%s1 + $0x90] sm:$0xff]
  %v48 = vld [vmem:[%s1 + $0x98] sm:$0xff]
  %v49 = vld [vmem:[%s1 + $0xa0] sm:$0xff]
  %v50 = vld [vmem:[%s1 + $0xa8] sm:$0xff]
  %v51 = vld [vmem:[%s1 + $0xb0] sm:$0xff]
  %v52 = vld [vmem:[%s1 + $0xb8] sm:$0xff]
  %v53 = vld [vmem:[%s1 + $0xc0] sm:$0xff]
  %v54 = vld [vmem:[%s1 + $0xc8] sm:$0xff]
  %v55 = vld [vmem:[%s1 + $0xd0] sm:$0xff]
  %v56 = vld [vmem:[%s1 + $0xd8] sm:$0xff]
  %v57 = vld [vmem:[%s1 + $0xe0] sm:$0xff]
  %v58 = vld [vmem:[%s1 + $0xe8] sm:$0xff]
  %v59 = vld [vmem:[%s1 + $0xf0] sm:$0xff]
  %v60 = vld [vmem:[%s1 + $0xf8] sm:$0xff]
  %v61 = vld [vmem:[%s1 + $0x100] sm:$0xff]
  %v62 = vld [vmem:[%s1 + $0x108] sm:$0xff]
  %v63 = vld [vmem:[%s1 + $0x110] sm:$0xff]
  %v64 = vld [vmem:[%s1 + $0x118] sm:$0xff]
  %v65 = vld [vmem:[%s1 + $0x120] sm:$0xff]
  %v66 = vld [vmem:[%s1 + $0x128] sm:$0xff]
  %v67 = vld [vmem:[%s1 + $0x130] sm:$0xff]
  %v68 = vld [vmem:[%s1 + $0x138] sm:$0xff]
  %v69 = vld [vmem:[%s1 + $0x140] sm:$0xff]
  %v70 = vld [vmem:[%s1 + $0x148] sm:$0xff]
  %v71 = vld [vmem:[%s1 + $0x150] sm:$0xff]
  %v72 = vld [vmem:[%s1 + $0x158] sm:$0xff]
  %v73 = vld [vmem:[%s1 + $0x160] sm:$0xff]
  %v74 = vld [vmem:[%s1 + $0x168] sm:$0xff]
  %v75 = vld [vmem:[%s1 + $0x170] sm:$0xff]
  %v76 = vld [vmem:[%s1 + $0x178] sm:$0xff]
  %v77 = vld [vmem:[%s1 + $0x180] sm:$0xff]
  %v78 = vld [vmem:[%s1 + $0x188] sm:$0xff]
  %v79 = vld [vmem:[%s1 + $0x190] sm:$0xff]
  %v80 = vld [vmem:[%s1 + $0x198] sm:$0xff]
  %v81 = vld [vmem:[%s2] sm:$0xff]
  %v82 = vld [vmem:[%s2 + $0x8] sm:$0xff]
  %v83 = vld [vmem:[%s2 + $0x10] sm:$0xff]
  %v84 = vld [vmem:[%s2 + $0x18] sm:$0xff]
  %v85 = vld [vmem:[%s2 + $0x20] sm:$0xff]
  %v86 = vld [vmem:[%s2 + $0x28] sm:$0xff]
  %v87 = vld [vmem:[%s2 + $0x30] sm:$0xff]
  %v88 = vld [vmem:[%s2 + $0x38] sm:$0xff]
  %v89 = vld [vmem:[%s2 + $0x40] sm:$0xff]
  %v90 = vld [vmem:[%s2 + $0x48] sm:$0xff]
  %v91 = vld [vmem:[%s2 + $0x50] sm:$0xff]
  %v92 = vld [vmem:[%s2 + $0x58] sm:$0xff]
  %v93 = vld [vmem:[%s2 + $0x60] sm:$0xff]
  %v94 = vld [vmem:[%s2 + $0x68] sm:$0xff]
  %v95 = vld [vmem:[%s2 + $0x70] sm:$0xff]
  %v96 = vld [vmem:[%s2 + $0x78] sm:$0xff]
  %v97 = vld [vmem:[%s2 + $0x80] sm:$0xff]
  %v98 = vld [vmem:[%s2 + $0x88] sm:$0xff]
  %v99 = vld [vmem:[%s2 + $0x90] sm:$0xff]
  %v100 = vld [vmem:[%s2 + $0x98] sm:$0xff]
  %v101 = vld [vmem:[%s2 + $0xa0] sm:$0xff]
  %v102 = vld [vmem:[%s2 + $0xa8] sm:$0xff]
  %v103 = vld [vmem:[%s2 + $0xb0] sm:$0xff]
  %v104 = vld [vmem:[%s2 + $0xb8] sm:$0xff]
  %v105 = vld [vmem:[%s2 + $0xc0] sm:$0xff]
  %v106 = vld [vmem:[%s2 + $0xc8] sm:$0xff]
  %v107 = vld [vmem:[%s2 + $0xd0] sm:$0xff]
  %v108 = vld [vmem:[%s2 + $0xd8] sm:$0xff]
  %v109 = vld [vmem:[%s2 + $0xe0] sm:$0xff]
  %v110 = vld [vmem:[%s2 + $0xe8] sm:$0xff]
  %v111 = vld [vmem:[%s2 + $0xf0] sm:$0xff]
  %v112 = vld [vmem:[%s2 + $0xf8] sm:$0xff]
  %v113 = vld [vmem:[%s2 + $0x100] sm:$0xff]
  %v114 = vld [vmem:[%s2 + $0x108] sm:$0xff]
  %v115 = vld [vmem:[%s2 + $0x110] sm:$0xff]
  %v116 = vld [vmem:[%s2 + $0x118] sm:$0xff]
  %v117 = vld [vmem:[%s2 + $0x120] sm:$0xff]
  %v118 = vld [vmem:[%s2 + $0x128] sm:$0xff]
  %v119 = vld [vmem:[%s2 + $0x130] sm:$0xff]
  %v120 = vld [vmem:[%s2 + $0x138] sm:$0xff]
  %v121 = vld [vmem:[%s2 + $0x140] sm:$0xff]
  %v122 = vld [vmem:[%s2 + $0x148] sm:$0xff]
  %v123 = vld [vmem:[%s2 + $0x150] sm:$0xff]
  %v124 = vld [vmem:[%s2 + $0x158] sm:$0xff]
  %v125 = vld [vmem:[%s2 + $0x160] sm:$0xff]
  %v126 = vld [vmem:[%s2 + $0x168] sm:$0xff]
  %v127 = vld [vmem:[%s2 + $0x170] sm:$0xff]
  %v128 = vld [vmem:[%s2 + $0x178] sm:$0xff]
  %v129 = vld [vmem:[%s2 + $0x180] sm:$0xff]
  %v130 = vld [vmem:[%s2 + $0x188] sm:$0xff]
  %v131 = vld [vmem:[%s2 + $0x190] sm:$0xff]
  %v132 = vld [vmem:[%s2 + $0x198] sm:$0xff]
  %134 = vset.pattern.permute.xlu0 0
  %135 = vperm.xlu0 %134, %v81
  %v136 = vpop.permute.xlu0 %135
  %139 = vset.pattern.permute.xlu0 0
  %140 = vperm.xlu0 %139, %v82
  %v141 = vpop.permute.xlu0 %140
  %144 = vset.pattern.permute.xlu0 0
  %145 = vperm.xlu0 %144, %v83
  %v146 = vpop.permute.xlu0 %145
  %149 = vset.pattern.permute.xlu0 0
  %150 = vperm.xlu0 %149, %v84
  %v151 = vpop.permute.xlu0 %150
  %154 = vset.pattern.permute.xlu0 0
  %155 = vperm.xlu0 %154, %v85
  %v156 = vpop.permute.xlu0 %155
  %159 = vset.pattern.permute.xlu0 0
  %160 = vperm.xlu0 %159, %v86
  %v161 = vpop.permute.xlu0 %160
  %164 = vset.pattern.permute.xlu0 0
  %165 = vperm.xlu0 %164, %v87
  %v166 = vpop.permute.xlu0 %165
  %169 = vset.pattern.permute.xlu0 0
  %170 = vperm.xlu0 %169, %v88
  %v171 = vpop.permute.xlu0 %170
  %174 = vset.pattern.permute.xlu0 0
  %175 = vperm.xlu0 %174, %v89
  %v176 = vpop.permute.xlu0 %175
  %179 = vset.pattern.permute.xlu0 0
  %180 = vperm.xlu0 %179, %v90
  %v181 = vpop.permute.xlu0 %180
  %184 = vset.pattern.permute.xlu0 0
  %185 = vperm.xlu0 %184, %v91
  %v186 = vpop.permute.xlu0 %185
  %189 = vset.pattern.permute.xlu0 0
  %190 = vperm.xlu0 %189, %v92
  %v191 = vpop.permute.xlu0 %190
  %194 = vset.pattern.permute.xlu0 0
  %195 = vperm.xlu0 %194, %v93
  %v196 = vpop.permute.xlu0 %195
  %199 = vset.pattern.permute.xlu0 0
  %200 = vperm.xlu0 %199, %v94
  %v201 = vpop.permute.xlu0 %200
  %204 = vset.pattern.permute.xlu0 0
  %205 = vperm.xlu0 %204, %v95
  %v206 = vpop.permute.xlu0 %205
  %209 = vset.pattern.permute.xlu0 0
  %210 = vperm.xlu0 %209, %v96
  %v211 = vpop.permute.xlu0 %210
  %214 = vset.pattern.permute.xlu0 0
  %215 = vperm.xlu0 %214, %v97
  %v216 = vpop.permute.xlu0 %215
  %219 = vset.pattern.permute.xlu0 0
  %220 = vperm.xlu0 %219, %v98
  %v221 = vpop.permute.xlu0 %220
  %224 = vset.pattern.permute.xlu0 0
  %225 = vperm.xlu0 %224, %v99
  %v226 = vpop.permute.xlu0 %225
  %229 = vset.pattern.permute.xlu0 0
  %230 = vperm.xlu0 %229, %v100
  %v231 = vpop.permute.xlu0 %230
  %234 = vset.pattern.permute.xlu0 0
  %235 = vperm.xlu0 %234, %v101
  %v236 = vpop.permute.xlu0 %235
  %239 = vset.pattern.permute.xlu0 0
  %240 = vperm.xlu0 %239, %v102
  %v241 = vpop.permute.xlu0 %240
  %244 = vset.pattern.permute.xlu0 0
  %245 = vperm.xlu0 %244, %v103
  %v246 = vpop.permute.xlu0 %245
  %249 = vset.pattern.permute.xlu0 0
  %250 = vperm.xlu0 %249, %v104
  %v251 = vpop.permute.xlu0 %250
  %254 = vset.pattern.permute.xlu0 0
  %255 = vperm.xlu0 %254, %v105
  %v256 = vpop.permute.xlu0 %255
  %259 = vset.pattern.permute.xlu0 0
  %260 = vperm.xlu0 %259, %v106
  %v261 = vpop.permute.xlu0 %260
  %264 = vset.pattern.permute.xlu0 0
  %265 = vperm.xlu0 %264, %v107
  %v266 = vpop.permute.xlu0 %265
  %269 = vset.pattern.permute.xlu0 0
  %270 = vperm.xlu0 %269, %v108
  %v271 = vpop.permute.xlu0 %270
  %274 = vset.pattern.permute.xlu0 0
  %275 = vperm.xlu0 %274, %v109
  %v276 = vpop.permute.xlu0 %275
  %279 = vset.pattern.permute.xlu0 0
  %280 = vperm.xlu0 %279, %v110
  %v281 = vpop.permute.xlu0 %280
  %284 = vset.pattern.permute.xlu0 0
  %285 = vperm.xlu0 %284, %v111
  %v286 = vpop.permute.xlu0 %285
  %289 = vset.pattern.permute.xlu0 0
  %290 = vperm.xlu0 %289, %v112
  %v291 = vpop.permute.xlu0 %290
  %294 = vset.pattern.permute.xlu0 0
  %295 = vperm.xlu0 %294, %v113
  %v296 = vpop.permute.xlu0 %295
  %299 = vset.pattern.permute.xlu0 0
  %300 = vperm.xlu0 %299, %v114
  %v301 = vpop.permute.xlu0 %300
  %304 = vset.pattern.permute.xlu0 0
  %305 = vperm.xlu0 %304, %v115
  %v306 = vpop.permute.xlu0 %305
  %309 = vset.pattern.permute.xlu0 0
  %310 = vperm.xlu0 %309, %v116
  %v311 = vpop.permute.xlu0 %310
  %314 = vset.pattern.permute.xlu0 0
  %315 = vperm.xlu0 %314, %v117
  %v316 = vpop.permute.xlu0 %315
  %319 = vset.pattern.permute.xlu0 0
  %320 = vperm.xlu0 %319, %v118
  %v321 = vpop.permute.xlu0 %320
  %324 = vset.pattern.permute.xlu0 0
  %325 = vperm.xlu0 %324, %v119
  %v326 = vpop.permute.xlu0 %325
  %329 = vset.pattern.permute.xlu0 0
  %330 = vperm.xlu0 %329, %v120
  %v331 = vpop.permute.xlu0 %330
  %334 = vset.pattern.permute.xlu0 0
  %335 = vperm.xlu0 %334, %v121
  %v336 = vpop.permute.xlu0 %335
  %339 = vset.pattern.permute.xlu0 0
  %340 = vperm.xlu0 %339, %v122
  %v341 = vpop.permute.xlu0 %340
  %344 = vset.pattern.permute.xlu0 0
  %345 = vperm.xlu0 %344, %v123
  %v346 = vpop.permute.xlu0 %345
  %349 = vset.pattern.permute.xlu0 0
  %350 = vperm.xlu0 %349, %v124
  %v351 = vpop.permute.xlu0 %350
  %354 = vset.pattern.permute.xlu0 0
  %355 = vperm.xlu0 %354, %v125
  %v356 = vpop.permute.xlu0 %355
  %359 = vset.pattern.permute.xlu0 0
  %360 = vperm.xlu0 %359, %v126
  %v361 = vpop.permute.xlu0 %360
  %364 = vset.pattern.permute.xlu0 0
  %365 = vperm.xlu0 %364, %v127
  %v366 = vpop.permute.xlu0 %365
  %369 = vset.pattern.permute.xlu0 0
  %370 = vperm.xlu0 %369, %v128
  %v371 = vpop.permute.xlu0 %370
  %374 = vset.pattern.permute.xlu0 0
  %375 = vperm.xlu0 %374, %v129
  %v376 = vpop.permute.xlu0 %375
  %379 = vset.pattern.permute.xlu0 0
  %380 = vperm.xlu0 %379, %v130
  %v381 = vpop.permute.xlu0 %380
  %384 = vset.pattern.permute.xlu0 0
  %385 = vperm.xlu0 %384, %v131
  %v386 = vpop.permute.xlu0 %385
  %389 = vset.pattern.permute.xlu0 0
  %390 = vperm.xlu0 %389, %v132
  %v391 = vpop.permute.xlu0 %390
  %vm393 = vcmask 39936
  %v395 = vsel %vm393, %v29, 0
  %v398 = vsel %vm393, %v30, 0
  %v401 = vsel %vm393, %v31, 0
  %v404 = vsel %vm393, %v32, 0
  %v407 = vsel %vm393, %v33, 0
  %v410 = vsel %vm393, %v34, 0
  %v413 = vsel %vm393, %v35, 0
  %v416 = vsel %vm393, %v36, 0
  %v419 = vsel %vm393, %v37, 0
  %v422 = vsel %vm393, %v38, 0
  %v425 = vsel %vm393, %v39, 0
  %v428 = vsel %vm393, %v40, 0
  %v431 = vsel %vm393, %v41, 0
  %v434 = vsel %vm393, %v42, 0
  %v437 = vsel %vm393, %v43, 0
  %v440 = vsel %vm393, %v44, 0
  %v443 = vsel %vm393, %v45, 0
  %v446 = vsel %vm393, %v46, 0
  %v449 = vsel %vm393, %v47, 0
  %v452 = vsel %vm393, %v48, 0
  %v455 = vsel %vm393, %v49, 0
  %v458 = vsel %vm393, %v50, 0
  %v461 = vsel %vm393, %v51, 0
  %v464 = vsel %vm393, %v52, 0
  %v467 = vsel %vm393, %v53, 0
  %v470 = vsel %vm393, %v54, 0
  %v473 = vsel %vm393, %v55, 0
  %v476 = vsel %vm393, %v56, 0
  %v479 = vsel %vm393, %v57, 0
  %v482 = vsel %vm393, %v58, 0
  %v485 = vsel %vm393, %v59, 0
  %v488 = vsel %vm393, %v60, 0
  %v491 = vsel %vm393, %v61, 0
  %v494 = vsel %vm393, %v62, 0
  %v497 = vsel %vm393, %v63, 0
  %v500 = vsel %vm393, %v64, 0
  %v503 = vsel %vm393, %v65, 0
  %v506 = vsel %vm393, %v66, 0
  %v509 = vsel %vm393, %v67, 0
  %v512 = vsel %vm393, %v68, 0
  %v515 = vsel %vm393, %v69, 0
  %v518 = vsel %vm393, %v70, 0
  %v521 = vsel %vm393, %v71, 0
  %v524 = vsel %vm393, %v72, 0
  %v527 = vsel %vm393, %v73, 0
  %v530 = vsel %vm393, %v74, 0
  %v533 = vsel %vm393, %v75, 0
  %v536 = vsel %vm393, %v76, 0
  %v539 = vsel %vm393, %v77, 0
  %v542 = vsel %vm393, %v78, 0
  %v545 = vsel %vm393, %v79, 0
  %v548 = vsel %vm393, %v80, 0
  %vm550 = vcmask 1044480
  %v552 = vsel %vm550, %v28, 0
  %554 = vmatpush.msra.mxu0 0.0
  %555 = vmatpush.msra.mxu0 0.0
  %556 = vmatpush.msra.mxu0 0.0
  %557 = vmatpush.msra.mxu0 0.0
  %558 = vmatpush.msra.mxu0 0.0
  %559 = vmatpush.msra.mxu0 0.0
  %560 = vmatpush.msra.mxu0 0.0
  %561 = vmatpush.msra.mxu0 0.0
  %562 = vmatpush.msra.mxu0 0.0
  %563 = vmatpush.msra.mxu0 0.0
  %564 = vmatpush.msra.mxu0 0.0
  %565 = vmatpush.msra.mxu0 0.0
  %566 = vmatpush.msra.mxu0 0.0
  %567 = vmatpush.msra.mxu0 0.0
  %568 = vmatpush.msra.mxu0 0.0
  %569 = vmatpush.msra.mxu0 %v552
  %570 = vmatmul.f32.gmra.mxu0 %v395
  %v571 = vpop.f32.mrf.mxu0
  %v572 = vadd.f32 %v136, %v571
  %573 = vmatmul.f32.gmra.mxu0 %v398
  %v574 = vpop.f32.mrf.mxu0
  %v575 = vadd.f32 %v141, %v574
  %576 = vmatmul.f32.gmra.mxu0 %v401
  %v577 = vpop.f32.mrf.mxu0
  %v578 = vadd.f32 %v146, %v577
  %579 = vmatmul.f32.gmra.mxu0 %v404
  %v580 = vpop.f32.mrf.mxu0
  %v581 = vadd.f32 %v151, %v580
  %582 = vmatmul.f32.gmra.mxu0 %v407
  %v583 = vpop.f32.mrf.mxu0
  %v584 = vadd.f32 %v156, %v583
  %585 = vmatmul.f32.gmra.mxu0 %v410
  %v586 = vpop.f32.mrf.mxu0
  %v587 = vadd.f32 %v161, %v586
  %588 = vmatmul.f32.gmra.mxu0 %v413
  %v589 = vpop.f32.mrf.mxu0
  %v590 = vadd.f32 %v166, %v589
  %591 = vmatmul.f32.gmra.mxu0 %v416
  %v592 = vpop.f32.mrf.mxu0
  %v593 = vadd.f32 %v171, %v592
  %594 = vmatmul.f32.gmra.mxu0 %v419
  %v595 = vpop.f32.mrf.mxu0
  %v596 = vadd.f32 %v176, %v595
  %597 = vmatmul.f32.gmra.mxu0 %v422
  %v598 = vpop.f32.mrf.mxu0
  %v599 = vadd.f32 %v181, %v598
  %600 = vmatmul.f32.gmra.mxu0 %v425
  %v601 = vpop.f32.mrf.mxu0
  %v602 = vadd.f32 %v186, %v601
  %603 = vmatmul.f32.gmra.mxu0 %v428
  %v604 = vpop.f32.mrf.mxu0
  %v605 = vadd.f32 %v191, %v604
  %606 = vmatmul.f32.gmra.mxu0 %v431
  %v607 = vpop.f32.mrf.mxu0
  %v608 = vadd.f32 %v196, %v607
  %609 = vmatmul.f32.gmra.mxu0 %v434
  %v610 = vpop.f32.mrf.mxu0
  %v611 = vadd.f32 %v201, %v610
  %612 = vmatmul.f32.gmra.mxu0 %v437
  %v613 = vpop.f32.mrf.mxu0
  %v614 = vadd.f32 %v206, %v613
  %615 = vmatmul.f32.gmra.mxu0 %v440
  %v616 = vpop.f32.mrf.mxu0
  %v617 = vadd.f32 %v211, %v616
  %618 = vmatmul.f32.gmra.mxu0 %v443
  %v619 = vpop.f32.mrf.mxu0
  %v620 = vadd.f32 %v216, %v619
  %621 = vmatmul.f32.gmra.mxu0 %v446
  %v622 = vpop.f32.mrf.mxu0
  %v623 = vadd.f32 %v221, %v622
  %624 = vmatmul.f32.gmra.mxu0 %v449
  %v625 = vpop.f32.mrf.mxu0
  %v626 = vadd.f32 %v226, %v625
  %627 = vmatmul.f32.gmra.mxu0 %v452
  %v628 = vpop.f32.mrf.mxu0
  %v629 = vadd.f32 %v231, %v628
  %630 = vmatmul.f32.gmra.mxu0 %v455
  %v631 = vpop.f32.mrf.mxu0
  %v632 = vadd.f32 %v236, %v631
  %633 = vmatmul.f32.gmra.mxu0 %v458
  %v634 = vpop.f32.mrf.mxu0
  %v635 = vadd.f32 %v241, %v634
  %636 = vmatmul.f32.gmra.mxu0 %v461
  %v637 = vpop.f32.mrf.mxu0
  %v638 = vadd.f32 %v246, %v637
  %639 = vmatmul.f32.gmra.mxu0 %v464
  %v640 = vpop.f32.mrf.mxu0
  %v641 = vadd.f32 %v251, %v640
  %642 = vmatmul.f32.gmra.mxu0 %v467
  %v643 = vpop.f32.mrf.mxu0
  %v644 = vadd.f32 %v256, %v643
  %645 = vmatmul.f32.gmra.mxu0 %v470
  %v646 = vpop.f32.mrf.mxu0
  %v647 = vadd.f32 %v261, %v646
  %648 = vmatmul.f32.gmra.mxu0 %v473
  %v649 = vpop.f32.mrf.mxu0
  %v650 = vadd.f32 %v266, %v649
  %651 = vmatmul.f32.gmra.mxu0 %v476
  %v652 = vpop.f32.mrf.mxu0
  %v653 = vadd.f32 %v271, %v652
  %654 = vmatmul.f32.gmra.mxu0 %v479
  %v655 = vpop.f32.mrf.mxu0
  %v656 = vadd.f32 %v276, %v655
  %657 = vmatmul.f32.gmra.mxu0 %v482
  %v658 = vpop.f32.mrf.mxu0
  %v659 = vadd.f32 %v281, %v658
  %660 = vmatmul.f32.gmra.mxu0 %v485
  %v661 = vpop.f32.mrf.mxu0
  %v662 = vadd.f32 %v286, %v661
  %663 = vmatmul.f32.gmra.mxu0 %v488
  %v664 = vpop.f32.mrf.mxu0
  %v665 = vadd.f32 %v291, %v664
  %666 = vmatmul.f32.gmra.mxu0 %v491
  %v667 = vpop.f32.mrf.mxu0
  %v668 = vadd.f32 %v296, %v667
  %669 = vmatmul.f32.gmra.mxu0 %v494
  %v670 = vpop.f32.mrf.mxu0
  %v671 = vadd.f32 %v301, %v670
  %672 = vmatmul.f32.gmra.mxu0 %v497
  %v673 = vpop.f32.mrf.mxu0
  %v674 = vadd.f32 %v306, %v673
  %675 = vmatmul.f32.gmra.mxu0 %v500
  %v676 = vpop.f32.mrf.mxu0
  %v677 = vadd.f32 %v311, %v676
  %678 = vmatmul.f32.gmra.mxu0 %v503
  %v679 = vpop.f32.mrf.mxu0
  %v680 = vadd.f32 %v316, %v679
  %681 = vmatmul.f32.gmra.mxu0 %v506
  %v682 = vpop.f32.mrf.mxu0
  %v683 = vadd.f32 %v321, %v682
  %684 = vmatmul.f32.gmra.mxu0 %v509
  %v685 = vpop.f32.mrf.mxu0
  %v686 = vadd.f32 %v326, %v685
  %687 = vmatmul.f32.gmra.mxu0 %v512
  %v688 = vpop.f32.mrf.mxu0
  %v689 = vadd.f32 %v331, %v688
  %690 = vmatmul.f32.gmra.mxu0 %v515
  %v691 = vpop.f32.mrf.mxu0
  %v692 = vadd.f32 %v336, %v691
  %693 = vmatmul.f32.gmra.mxu0 %v518
  %v694 = vpop.f32.mrf.mxu0
  %v695 = vadd.f32 %v341, %v694
  %696 = vmatmul.f32.gmra.mxu0 %v521
  %v697 = vpop.f32.mrf.mxu0
  %v698 = vadd.f32 %v346, %v697
  %699 = vmatmul.f32.gmra.mxu0 %v524
  %v700 = vpop.f32.mrf.mxu0
  %v701 = vadd.f32 %v351, %v700
  %702 = vmatmul.f32.gmra.mxu0 %v527
  %v703 = vpop.f32.mrf.mxu0
  %v704 = vadd.f32 %v356, %v703
  %705 = vmatmul.f32.gmra.mxu0 %v530
  %v706 = vpop.f32.mrf.mxu0
  %v707 = vadd.f32 %v361, %v706
  %708 = vmatmul.f32.gmra.mxu0 %v533
  %v709 = vpop.f32.mrf.mxu0
  %v710 = vadd.f32 %v366, %v709
  %711 = vmatmul.f32.gmra.mxu0 %v536
  %v712 = vpop.f32.mrf.mxu0
  %v713 = vadd.f32 %v371, %v712
  %714 = vmatmul.f32.gmra.mxu0 %v539
  %v715 = vpop.f32.mrf.mxu0
  %v716 = vadd.f32 %v376, %v715
  %717 = vmatmul.f32.gmra.mxu0 %v542
  %v718 = vpop.f32.mrf.mxu0
  %v719 = vadd.f32 %v381, %v718
  %720 = vmatmul.f32.gmra.mxu0 %v545
  %v721 = vpop.f32.mrf.mxu0
  %v722 = vadd.f32 %v386, %v721
  %723 = vmatmul.f32.gmra.mxu0 %v548
  %v724 = vpop.f32.mrf.mxu0
  %v725 = vadd.f32 %v391, %v724
  %726 = vdwg.mxu0
  %v727 = vtanh.pop %v572
  %v728 = vtanh.pop %v575
  %v729 = vtanh.pop %v578
  %v730 = vtanh.pop %v581
  %v731 = vld [vmem:[%s3] sm:$0xff]
  %v732 = vld [vmem:[%s3 + $0x8] sm:$0xff]
  %v733 = vld [vmem:[%s3 + $0x10] sm:$0xff]
  %v734 = vld [vmem:[%s3 + $0x18] sm:$0xff]
  %v735 = vld [vmem:[%s3 + $0x20] sm:$0xff]
  %v736 = vld [vmem:[%s3 + $0x28] sm:$0xff]
  %v737 = vld [vmem:[%s3 + $0x30] sm:$0xff]
  %v738 = vld [vmem:[%s3 + $0x38] sm:$0xff]
  %v739 = vld [vmem:[%s3 + $0x40] sm:$0xff]
  %v740 = vld [vmem:[%s3 + $0x48] sm:$0xff]
  %v741 = vld [vmem:[%s3 + $0x50] sm:$0xff]
  %v742 = vld [vmem:[%s3 + $0x58] sm:$0xff]
  %vm743 = vcmask 261120
  %v745 = vsel %vm743, %v731, 0
  %v748 = vsel %vm743, %v732, 0
  %v751 = vsel %vm743, %v733, 0
  %v754 = vsel %vm743, %v734, 0
  %v757 = vsel %vm743, %v735, 0
  %v760 = vsel %vm743, %v736, 0
  %v763 = vsel %vm743, %v737, 0
  %v766 = vsel %vm743, %v738, 0
  %v769 = vsel %vm743, %v739, 0
  %v772 = vsel %vm743, %v740, 0
  %v775 = vsel %vm743, %v741, 0
  %v778 = vsel %vm743, %v742, 0
  %780 = vmatpush.msra.mxu0 0.0
  %781 = vmatpush.msra.mxu0 0.0
  %782 = vmatpush.msra.mxu0 0.0
  %783 = vmatpush.msra.mxu0 0.0
  %784 = vmatpush.msra.mxu0 0.0
  %785 = vmatpush.msra.mxu0 0.0
  %786 = vmatpush.msra.mxu0 0.0
  %787 = vmatpush.msra.mxu0 0.0
  %788 = vmatpush.msra.mxu0 0.0
  %789 = vmatpush.msra.mxu0 0.0
  %790 = vmatpush.msra.mxu0 0.0
  %791 = vmatpush.msra.mxu0 0.0
  %792 = vmatpush.msra.mxu0 %v730
  %793 = vmatpush.msra.mxu0 %v729
  %794 = vmatpush.msra.mxu0 %v728
  %795 = vmatpush.msra.mxu0 %v727
  %796 = vmatmul.f32.gmra.mxu0 %v745
  %v797 = vpop.f32.mrf.mxu0
  %v798 = vadd.f32 0.0, %v797
  %799 = vmatmul.f32.gmra.mxu0 %v748
  %v800 = vpop.f32.mrf.mxu0
  %v801 = vadd.f32 0.0, %v800
  %802 = vmatmul.f32.gmra.mxu0 %v751
  %v803 = vpop.f32.mrf.mxu0
  %v804 = vadd.f32 0.0, %v803
  %805 = vmatmul.f32.gmra.mxu0 %v754
  %v806 = vpop.f32.mrf.mxu0
  %v807 = vadd.f32 0.0, %v806
  %808 = vmatmul.f32.gmra.mxu0 %v757
  %v809 = vpop.f32.mrf.mxu0
  %v810 = vadd.f32 0.0, %v809
  %811 = vmatmul.f32.gmra.mxu0 %v760
  %v812 = vpop.f32.mrf.mxu0
  %v813 = vadd.f32 0.0, %v812
  %814 = vmatmul.f32.gmra.mxu0 %v763
  %v815 = vpop.f32.mrf.mxu0
  %v816 = vadd.f32 0.0, %v815
  %817 = vmatmul.f32.gmra.mxu0 %v766
  %v818 = vpop.f32.mrf.mxu0
  %v819 = vadd.f32 0.0, %v818
  %820 = vmatmul.f32.gmra.mxu0 %v769
  %v821 = vpop.f32.mrf.mxu0
  %v822 = vadd.f32 0.0, %v821
  %823 = vmatmul.f32.gmra.mxu0 %v772
  %v824 = vpop.f32.mrf.mxu0
  %v825 = vadd.f32 0.0, %v824
  %826 = vmatmul.f32.gmra.mxu0 %v775
  %v827 = vpop.f32.mrf.mxu0
  %v828 = vadd.f32 0.0, %v827
  %829 = vmatmul.f32.gmra.mxu0 %v778
  %v830 = vpop.f32.mrf.mxu0
  %v831 = vadd.f32 0.0, %v830
  %832 = vdwg.mxu0
  %v833 = vadd.f32 %v584, %v798
  %v834 = vadd.f32 %v587, %v801
  %v835 = vadd.f32 %v590, %v804
  %v836 = vadd.f32 %v593, %v807
  %v837 = vadd.f32 %v596, %v810
  %v838 = vadd.f32 %v599, %v813
  %v839 = vadd.f32 %v602, %v816
  %v840 = vadd.f32 %v605, %v819
  %v841 = vadd.f32 %v608, %v822
  %v842 = vadd.f32 %v611, %v825
  %v843 = vadd.f32 %v614, %v828
  %v844 = vadd.f32 %v617, %v831
  %v845 = vtanh.pop %v833
  %v846 = vtanh.pop %v834
  %v847 = vtanh.pop %v835
  %v848 = vtanh.pop %v836
  %v849 = vtanh.pop %v837
  %v850 = vtanh.pop %v838
  %v851 = vtanh.pop %v839
  %v852 = vtanh.pop %v840
  %v853 = vtanh.pop %v841
  %v854 = vtanh.pop %v842
  %v855 = vtanh.pop %v843
  %v856 = vtanh.pop %v844
  %v857 = vld [vmem:[%s4] sm:$0xff]
  %v858 = vld [vmem:[%s4 + $0x8] sm:$0xff]
  %v859 = vld [vmem:[%s4 + $0x10] sm:$0xff]
  %v860 = vld [vmem:[%s4 + $0x18] sm:$0xff]
  %v861 = vmul.f32 %v727, %v853
  %v862 = vmul.f32 %v728, %v854
  %v863 = vmul.f32 %v729, %v855
  %v864 = vmul.f32 %v730, %v856
  %v866 = vsel %vm743, %v857, 0
  %v869 = vsel %vm743, %v858, 0
  %v872 = vsel %vm743, %v859, 0
  %v875 = vsel %vm743, %v860, 0
  %877 = vmatpush.msra.mxu0 0.0
  %878 = vmatpush.msra.mxu0 0.0
  %879 = vmatpush.msra.mxu0 0.0
  %880 = vmatpush.msra.mxu0 0.0
  %881 = vmatpush.msra.mxu0 0.0
  %882 = vmatpush.msra.mxu0 0.0
  %883 = vmatpush.msra.mxu0 0.0
  %884 = vmatpush.msra.mxu0 0.0
  %885 = vmatpush.msra.mxu0 0.0
  %886 = vmatpush.msra.mxu0 0.0
  %887 = vmatpush.msra.mxu0 0.0
  %888 = vmatpush.msra.mxu0 0.0
  %889 = vmatpush.msra.mxu0 %v864
  %890 = vmatpush.msra.mxu0 %v863
  %891 = vmatpush.msra.mxu0 %v862
  %892 = vmatpush.msra.mxu0 %v861
  %893 = vmatmul.f32.gmra.mxu0 %v866
  %v894 = vpop.f32.mrf.mxu0
  %v895 = vadd.f32 0.0, %v894
  %896 = vmatmul.f32.gmra.mxu0 %v869
  %v897 = vpop.f32.mrf.mxu0
  %v898 = vadd.f32 0.0, %v897
  %899 = vmatmul.f32.gmra.mxu0 %v872
  %v900 = vpop.f32.mrf.mxu0
  %v901 = vadd.f32 0.0, %v900
  %902 = vmatmul.f32.gmra.mxu0 %v875
  %v903 = vpop.f32.mrf.mxu0
  %v904 = vadd.f32 0.0, %v903
  %905 = vdwg.mxu0
  %v906 = vadd.f32 %v620, %v895
  %v907 = vadd.f32 %v623, %v898
  %v908 = vadd.f32 %v626, %v901
  %v909 = vadd.f32 %v629, %v904
  %v910 = vtanh.pop %v906
  %v911 = vtanh.pop %v907
  %v912 = vtanh.pop %v908
  %v913 = vtanh.pop %v909
  %v914 = vsub.f32 1.0, %v849
  %v915 = vsub.f32 1.0, %v850
  %v916 = vsub.f32 1.0, %v851
  %v917 = vsub.f32 1.0, %v852
  %v918 = vmul.f32 %v914, %v910
  %v919 = vmul.f32 %v915, %v911
  %v920 = vmul.f32 %v916, %v912
  %v921 = vmul.f32 %v917, %v913
  %v922 = vmul.f32 %v845, %v727
  %v923 = vmul.f32 %v846, %v728
  %v924 = vmul.f32 %v847, %v729
  %v925 = vmul.f32 %v848, %v730
  %v926 = vadd.f32 %v918, %v922
  %v927 = vadd.f32 %v919, %v923
  %v928 = vadd.f32 %v920, %v924
  %v929 = vadd.f32 %v921, %v925
  %s930 = scalar_lea.vmem %s3, 96
  %v931 = vld [vmem:[%s930] sm:$0xff]
  %v932 = vld [vmem:[%s930 + $0x8] sm:$0xff]
  %v933 = vld [vmem:[%s930 + $0x10] sm:$0xff]
  %v934 = vld [vmem:[%s930 + $0x18] sm:$0xff]
  %v935 = vld [vmem:[%s930 + $0x20] sm:$0xff]
  %v936 = vld [vmem:[%s930 + $0x28] sm:$0xff]
  %v937 = vld [vmem:[%s930 + $0x30] sm:$0xff]
  %v938 = vld [vmem:[%s930 + $0x38] sm:$0xff]
  %v939 = vld [vmem:[%s930 + $0x40] sm:$0xff]
  %v940 = vld [vmem:[%s930 + $0x48] sm:$0xff]
  %v941 = vld [vmem:[%s930 + $0x50] sm:$0xff]
  %v942 = vld [vmem:[%s930 + $0x58] sm:$0xff]
  %v944 = vsel %vm743, %v931, 0
  %v947 = vsel %vm743, %v932, 0
  %v950 = vsel %vm743, %v933, 0
  %v953 = vsel %vm743, %v934, 0
  %v956 = vsel %vm743, %v935, 0
  %v959 = vsel %vm743, %v936, 0
  %v962 = vsel %vm743, %v937, 0
  %v965 = vsel %vm743, %v938, 0
  %v968 = vsel %vm743, %v939, 0
  %v971 = vsel %vm743, %v940, 0
  %v974 = vsel %vm743, %v941, 0
  %v977 = vsel %vm743, %v942, 0
  %979 = vmatpush.msra.mxu0 0.0
  %980 = vmatpush.msra.mxu0 0.0
  %981 = vmatpush.msra.mxu0 0.0
  %982 = vmatpush.msra.mxu0 0.0
  %983 = vmatpush.msra.mxu0 0.0
  %984 = vmatpush.msra.mxu0 0.0
  %985 = vmatpush.msra.mxu0 0.0
  %986 = vmatpush.msra.mxu0 0.0
  %987 = vmatpush.msra.mxu0 0.0
  %988 = vmatpush.msra.mxu0 0.0
  %989 = vmatpush.msra.mxu0 0.0
  %990 = vmatpush.msra.mxu0 0.0
  %991 = vmatpush.msra.mxu0 %v929
  %992 = vmatpush.msra.mxu0 %v928
  %993 = vmatpush.msra.mxu0 %v927
  %994 = vmatpush.msra.mxu0 %v926
  %995 = vmatmul.f32.gmra.mxu0 %v944
  %v996 = vpop.f32.mrf.mxu0
  %v997 = vadd.f32 0.0, %v996
  %998 = vmatmul.f32.gmra.mxu0 %v947
  %v999 = vpop.f32.mrf.mxu0
  %v1000 = vadd.f32 0.0, %v999
  %1001 = vmatmul.f32.gmra.mxu0 %v950
  %v1002 = vpop.f32.mrf.mxu0
  %v1003 = vadd.f32 0.0, %v1002
  %1004 = vmatmul.f32.gmra.mxu0 %v953
  %v1005 = vpop.f32.mrf.mxu0
  %v1006 = vadd.f32 0.0, %v1005
  %1007 = vmatmul.f32.gmra.mxu0 %v956
  %v1008 = vpop.f32.mrf.mxu0
  %v1009 = vadd.f32 0.0, %v1008
  %1010 = vmatmul.f32.gmra.mxu0 %v959
  %v1011 = vpop.f32.mrf.mxu0
  %v1012 = vadd.f32 0.0, %v1011
  %1013 = vmatmul.f32.gmra.mxu0 %v962
  %v1014 = vpop.f32.mrf.mxu0
  %v1015 = vadd.f32 0.0, %v1014
  %1016 = vmatmul.f32.gmra.mxu0 %v965
  %v1017 = vpop.f32.mrf.mxu0
  %v1018 = vadd.f32 0.0, %v1017
  %1019 = vmatmul.f32.gmra.mxu0 %v968
  %v1020 = vpop.f32.mrf.mxu0
  %v1021 = vadd.f32 0.0, %v1020
  %1022 = vmatmul.f32.gmra.mxu0 %v971
  %v1023 = vpop.f32.mrf.mxu0
  %v1024 = vadd.f32 0.0, %v1023
  %1025 = vmatmul.f32.gmra.mxu0 %v974
  %v1026 = vpop.f32.mrf.mxu0
  %v1027 = vadd.f32 0.0, %v1026
  %1028 = vmatmul.f32.gmra.mxu0 %v977
  %v1029 = vpop.f32.mrf.mxu0
  %v1030 = vadd.f32 0.0, %v1029
  %1031 = vdwg.mxu0
  %v1032 = vadd.f32 %v632, %v997
  %v1033 = vadd.f32 %v635, %v1000
  %v1034 = vadd.f32 %v638, %v1003
  %v1035 = vadd.f32 %v641, %v1006
  %v1036 = vadd.f32 %v644, %v1009
  %v1037 = vadd.f32 %v647, %v1012
  %v1038 = vadd.f32 %v650, %v1015
  %v1039 = vadd.f32 %v653, %v1018
  %v1040 = vadd.f32 %v656, %v1021
  %v1041 = vadd.f32 %v659, %v1024
  %v1042 = vadd.f32 %v662, %v1027
  %v1043 = vadd.f32 %v665, %v1030
  %v1044 = vtanh.pop %v1032
  %v1045 = vtanh.pop %v1033
  %v1046 = vtanh.pop %v1034
  %v1047 = vtanh.pop %v1035
  %v1048 = vtanh.pop %v1036
  %v1049 = vtanh.pop %v1037
  %v1050 = vtanh.pop %v1038
  %v1051 = vtanh.pop %v1039
  %v1052 = vtanh.pop %v1040
  %v1053 = vtanh.pop %v1041
  %v1054 = vtanh.pop %v1042
  %v1055 = vtanh.pop %v1043
  %s1056 = scalar_lea.vmem %s4, 32
  %v1057 = vld [vmem:[%s1056] sm:$0xff]
  %v1058 = vld [vmem:[%s1056 + $0x8] sm:$0xff]
  %v1059 = vld [vmem:[%s1056 + $0x10] sm:$0xff]
  %v1060 = vld [vmem:[%s1056 + $0x18] sm:$0xff]
  %v1061 = vmul.f32 %v926, %v1052
  %v1062 = vmul.f32 %v927, %v1053
  %v1063 = vmul.f32 %v928, %v1054
  %v1064 = vmul.f32 %v929, %v1055
  %v1066 = vsel %vm743, %v1057, 0
  %v1069 = vsel %vm743, %v1058, 0
  %v1072 = vsel %vm743, %v1059, 0
  %v1075 = vsel %vm743, %v1060, 0
  %1077 = vmatpush.msra.mxu0 0.0
  %1078 = vmatpush.msra.mxu0 0.0
  %1079 = vmatpush.msra.mxu0 0.0
  %1080 = vmatpush.msra.mxu0 0.0
  %1081 = vmatpush.msra.mxu0 0.0
  %1082 = vmatpush.msra.mxu0 0.0
  %1083 = vmatpush.msra.mxu0 0.0
  %1084 = vmatpush.msra.mxu0 0.0
  %1085 = vmatpush.msra.mxu0 0.0
  %1086 = vmatpush.msra.mxu0 0.0
  %1087 = vmatpush.msra.mxu0 0.0
  %1088 = vmatpush.msra.mxu0 0.0
  %1089 = vmatpush.msra.mxu0 %v1064
  %1090 = vmatpush.msra.mxu0 %v1063
  %1091 = vmatpush.msra.mxu0 %v1062
  %1092 = vmatpush.msra.mxu0 %v1061
  %1093 = vmatmul.f32.gmra.mxu0 %v1066
  %v1094 = vpop.f32.mrf.mxu0
  %v1095 = vadd.f32 0.0, %v1094
  %1096 = vmatmul.f32.gmra.mxu0 %v1069
  %v1097 = vpop.f32.mrf.mxu0
  %v1098 = vadd.f32 0.0, %v1097
  %1099 = vmatmul.f32.gmra.mxu0 %v1072
  %v1100 = vpop.f32.mrf.mxu0
  %v1101 = vadd.f32 0.0, %v1100
  %1102 = vmatmul.f32.gmra.mxu0 %v1075
  %v1103 = vpop.f32.mrf.mxu0
  %v1104 = vadd.f32 0.0, %v1103
  %1105 = vdwg.mxu0
  %v1106 = vadd.f32 %v668, %v1095
  %v1107 = vadd.f32 %v671, %v1098
  %v1108 = vadd.f32 %v674, %v1101
  %v1109 = vadd.f32 %v677, %v1104
  %v1110 = vtanh.pop %v1106
  %v1111 = vtanh.pop %v1107
  %v1112 = vtanh.pop %v1108
  %v1113 = vtanh.pop %v1109
  %v1114 = vsub.f32 1.0, %v1048
  %v1115 = vsub.f32 1.0, %v1049
  %v1116 = vsub.f32 1.0, %v1050
  %v1117 = vsub.f32 1.0, %v1051
  %v1118 = vmul.f32 %v1114, %v1110
  %v1119 = vmul.f32 %v1115, %v1111
  %v1120 = vmul.f32 %v1116, %v1112
  %v1121 = vmul.f32 %v1117, %v1113
  %v1122 = vmul.f32 %v1044, %v926
  %v1123 = vmul.f32 %v1045, %v927
  %v1124 = vmul.f32 %v1046, %v928
  %v1125 = vmul.f32 %v1047, %v929
  %v1126 = vadd.f32 %v1118, %v1122
  %v1127 = vadd.f32 %v1119, %v1123
  %v1128 = vadd.f32 %v1120, %v1124
  %v1129 = vadd.f32 %v1121, %v1125
  %s1130 = scalar_lea.vmem %s3, 192
  %v1131 = vld [vmem:[%s1130] sm:$0xff]
  %v1132 = vld [vmem:[%s1130 + $0x8] sm:$0xff]
  %v1133 = vld [vmem:[%s1130 + $0x10] sm:$0xff]
  %v1134 = vld [vmem:[%s1130 + $0x18] sm:$0xff]
  %v1135 = vld [vmem:[%s1130 + $0x20] sm:$0xff]
  %v1136 = vld [vmem:[%s1130 + $0x28] sm:$0xff]
  %v1137 = vld [vmem:[%s1130 + $0x30] sm:$0xff]
  %v1138 = vld [vmem:[%s1130 + $0x38] sm:$0xff]
  %v1139 = vld [vmem:[%s1130 + $0x40] sm:$0xff]
  %v1140 = vld [vmem:[%s1130 + $0x48] sm:$0xff]
  %v1141 = vld [vmem:[%s1130 + $0x50] sm:$0xff]
  %v1142 = vld [vmem:[%s1130 + $0x58] sm:$0xff]
  %v1144 = vsel %vm743, %v1131, 0
  %v1147 = vsel %vm743, %v1132, 0
  %v1150 = vsel %vm743, %v1133, 0
  %v1153 = vsel %vm743, %v1134, 0
  %v1156 = vsel %vm743, %v1135, 0
  %v1159 = vsel %vm743, %v1136, 0
  %v1162 = vsel %vm743, %v1137, 0
  %v1165 = vsel %vm743, %v1138, 0
  %v1168 = vsel %vm743, %v1139, 0
  %v1171 = vsel %vm743, %v1140, 0
  %v1174 = vsel %vm743, %v1141, 0
  %v1177 = vsel %vm743, %v1142, 0
  %1179 = vmatpush.msra.mxu0 0.0
  %1180 = vmatpush.msra.mxu0 0.0
  %1181 = vmatpush.msra.mxu0 0.0
  %1182 = vmatpush.msra.mxu0 0.0
  %1183 = vmatpush.msra.mxu0 0.0
  %1184 = vmatpush.msra.mxu0 0.0
  %1185 = vmatpush.msra.mxu0 0.0
  %1186 = vmatpush.msra.mxu0 0.0
  %1187 = vmatpush.msra.mxu0 0.0
  %1188 = vmatpush.msra.mxu0 0.0
  %1189 = vmatpush.msra.mxu0 0.0
  %1190 = vmatpush.msra.mxu0 0.0
  %1191 = vmatpush.msra.mxu0 %v1129
  %1192 = vmatpush.msra.mxu0 %v1128
  %1193 = vmatpush.msra.mxu0 %v1127
  %1194 = vmatpush.msra.mxu0 %v1126
  %1195 = vmatmul.f32.gmra.mxu0 %v1144
  %v1196 = vpop.f32.mrf.mxu0
  %v1197 = vadd.f32 0.0, %v1196
  %1198 = vmatmul.f32.gmra.mxu0 %v1147
  %v1199 = vpop.f32.mrf.mxu0
  %v1200 = vadd.f32 0.0, %v1199
  %1201 = vmatmul.f32.gmra.mxu0 %v1150
  %v1202 = vpop.f32.mrf.mxu0
  %v1203 = vadd.f32 0.0, %v1202
  %1204 = vmatmul.f32.gmra.mxu0 %v1153
  %v1205 = vpop.f32.mrf.mxu0
  %v1206 = vadd.f32 0.0, %v1205
  %1207 = vmatmul.f32.gmra.mxu0 %v1156
  %v1208 = vpop.f32.mrf.mxu0
  %v1209 = vadd.f32 0.0, %v1208
  %1210 = vmatmul.f32.gmra.mxu0 %v1159
  %v1211 = vpop.f32.mrf.mxu0
  %v1212 = vadd.f32 0.0, %v1211
  %1213 = vmatmul.f32.gmra.mxu0 %v1162
  %v1214 = vpop.f32.mrf.mxu0
  %v1215 = vadd.f32 0.0, %v1214
  %1216 = vmatmul.f32.gmra.mxu0 %v1165
  %v1217 = vpop.f32.mrf.mxu0
  %v1218 = vadd.f32 0.0, %v1217
  %1219 = vmatmul.f32.gmra.mxu0 %v1168
  %v1220 = vpop.f32.mrf.mxu0
  %v1221 = vadd.f32 0.0, %v1220
  %1222 = vmatmul.f32.gmra.mxu0 %v1171
  %v1223 = vpop.f32.mrf.mxu0
  %v1224 = vadd.f32 0.0, %v1223
  %1225 = vmatmul.f32.gmra.mxu0 %v1174
  %v1226 = vpop.f32.mrf.mxu0
  %v1227 = vadd.f32 0.0, %v1226
  %1228 = vmatmul.f32.gmra.mxu0 %v1177
  %v1229 = vpop.f32.mrf.mxu0
  %v1230 = vadd.f32 0.0, %v1229
  %1231 = vdwg.mxu0
  %v1232 = vadd.f32 %v680, %v1197
  %v1233 = vadd.f32 %v683, %v1200
  %v1234 = vadd.f32 %v686, %v1203
  %v1235 = vadd.f32 %v689, %v1206
  %v1236 = vadd.f32 %v692, %v1209
  %v1237 = vadd.f32 %v695, %v1212
  %v1238 = vadd.f32 %v698, %v1215
  %v1239 = vadd.f32 %v701, %v1218
  %v1240 = vadd.f32 %v704, %v1221
  %v1241 = vadd.f32 %v707, %v1224
  %v1242 = vadd.f32 %v710, %v1227
  %v1243 = vadd.f32 %v713, %v1230
  %v1244 = vtanh.pop %v1232
  %v1245 = vtanh.pop %v1233
  %v1246 = vtanh.pop %v1234
  %v1247 = vtanh.pop %v1235
  %v1248 = vtanh.pop %v1236
  %v1249 = vtanh.pop %v1237
  %v1250 = vtanh.pop %v1238
  %v1251 = vtanh.pop %v1239
  %v1252 = vtanh.pop %v1240
  %v1253 = vtanh.pop %v1241
  %v1254 = vtanh.pop %v1242
  %v1255 = vtanh.pop %v1243
  %s1256 = scalar_lea.vmem %s4, 64
  %v1257 = vld [vmem:[%s1256] sm:$0xff]
  %v1258 = vld [vmem:[%s1256 + $0x8] sm:$0xff]
  %v1259 = vld [vmem:[%s1256 + $0x10] sm:$0xff]
  %v1260 = vld [vmem:[%s1256 + $0x18] sm:$0xff]
  %v1261 = vmul.f32 %v1126, %v1252
  %v1262 = vmul.f32 %v1127, %v1253
  %v1263 = vmul.f32 %v1128, %v1254
  %v1264 = vmul.f32 %v1129, %v1255
  %v1266 = vsel %vm743, %v1257, 0
  %v1269 = vsel %vm743, %v1258, 0
  %v1272 = vsel %vm743, %v1259, 0
  %v1275 = vsel %vm743, %v1260, 0
  %1277 = vmatpush.msra.mxu0 0.0
  %1278 = vmatpush.msra.mxu0 0.0
  %1279 = vmatpush.msra.mxu0 0.0
  %1280 = vmatpush.msra.mxu0 0.0
  %1281 = vmatpush.msra.mxu0 0.0
  %1282 = vmatpush.msra.mxu0 0.0
  %1283 = vmatpush.msra.mxu0 0.0
  %1284 = vmatpush.msra.mxu0 0.0
  %1285 = vmatpush.msra.mxu0 0.0
  %1286 = vmatpush.msra.mxu0 0.0
  %1287 = vmatpush.msra.mxu0 0.0
  %1288 = vmatpush.msra.mxu0 0.0
  %1289 = vmatpush.msra.mxu0 %v1264
  %1290 = vmatpush.msra.mxu0 %v1263
  %1291 = vmatpush.msra.mxu0 %v1262
  %1292 = vmatpush.msra.mxu0 %v1261
  %1293 = vmatmul.f32.gmra.mxu0 %v1266
  %v1294 = vpop.f32.mrf.mxu0
  %v1295 = vadd.f32 0.0, %v1294
  %1296 = vmatmul.f32.gmra.mxu0 %v1269
  %v1297 = vpop.f32.mrf.mxu0
  %v1298 = vadd.f32 0.0, %v1297
  %1299 = vmatmul.f32.gmra.mxu0 %v1272
  %v1300 = vpop.f32.mrf.mxu0
  %v1301 = vadd.f32 0.0, %v1300
  %1302 = vmatmul.f32.gmra.mxu0 %v1275
  %v1303 = vpop.f32.mrf.mxu0
  %v1304 = vadd.f32 0.0, %v1303
  %1305 = vdwg.mxu0
  %v1306 = vadd.f32 %v716, %v1295
  %v1307 = vadd.f32 %v719, %v1298
  %v1308 = vadd.f32 %v722, %v1301
  %v1309 = vadd.f32 %v725, %v1304
  %v1310 = vtanh.pop %v1306
  %v1311 = vtanh.pop %v1307
  %v1312 = vtanh.pop %v1308
  %v1313 = vtanh.pop %v1309
  %v1314 = vsub.f32 1.0, %v1248
  %v1315 = vsub.f32 1.0, %v1249
  %v1316 = vsub.f32 1.0, %v1250
  %v1317 = vsub.f32 1.0, %v1251
  %v1318 = vmul.f32 %v1314, %v1310
  %v1319 = vmul.f32 %v1315, %v1311
  %v1320 = vmul.f32 %v1316, %v1312
  %v1321 = vmul.f32 %v1317, %v1313
  %v1322 = vmul.f32 %v1244, %v1126
  %v1323 = vmul.f32 %v1245, %v1127
  %v1324 = vmul.f32 %v1246, %v1128
  %v1325 = vmul.f32 %v1247, %v1129
  %v1326 = vadd.f32 %v1318, %v1322
  %v1327 = vadd.f32 %v1319, %v1323
  %v1328 = vadd.f32 %v1320, %v1324
  %v1329 = vadd.f32 %v1321, %v1325
  %v1330 = vld [vmem:[%s5] sm:$0xff]
  %v1331 = vld [vmem:[%s5 + $0x8] sm:$0xff]
  %v1332 = vld [vmem:[%s5 + $0x10] sm:$0xff]
  %v1333 = vld [vmem:[%s5 + $0x18] sm:$0xff]
  %1335 = vset.pattern.permute.xlu0 0
  %1336 = vperm.xlu0 %1335, %v1330
  %v1337 = vpop.permute.xlu0 %1336
  %1340 = vset.pattern.permute.xlu0 0
  %1341 = vperm.xlu0 %1340, %v1331
  %v1342 = vpop.permute.xlu0 %1341
  %1345 = vset.pattern.permute.xlu0 0
  %1346 = vperm.xlu0 %1345, %v1332
  %v1347 = vpop.permute.xlu0 %1346
  %1350 = vset.pattern.permute.xlu0 0
  %1351 = vperm.xlu0 %1350, %v1333
  %v1352 = vpop.permute.xlu0 %1351
  %v1354 = vmul.f32 %v1326, %v1337
  %v1355 = vmul.f32 %v1327, %v1342
  %v1356 = vmul.f32 %v1328, %v1347
  %v1357 = vmul.f32 %v1329, %v1352
  %v1358 = vadd.f32 %v1354, %v1355
  %v1359 = vadd.f32 %v1358, %v1356
  %v1360 = vadd.f32 %v1359, %v1357
  %v1361 = vrot.slane %v1360, 4
  %v1362 = vadd.f32 %v1360, %v1361
  %v1363 = vrot.slane %v1362, 2
  %v1364 = vadd.f32 %v1362, %v1363
  %v1365 = vrot.slane %v1364, 1
  %v1366 = vadd.f32 %v1364, %v1365
  %v1367 = vld [vmem:[#allocation2] sm:$0x1]
  %1369 = vset.pattern.permute.xlu0 0
  %1370 = vperm.xlu0 %1369, %v1367
  %v1371 = vpop.permute.xlu0 %1370
  %v1373 = vperm.slane %v1371, 0
  %v1374 = vadd.f32 %v1366, %v1373
  %1375 = vst [vmem:[%s7] sm:$0x1] %v1374
  // Predicated region
  $region30: #{net_dgm_forward.1} parent=0 // pred_check
    _
  $region31: #{net_dgm_forward.1} parent=0 // pred_check_branch
    %1377 = sbr.rel (0) target = $region33
  $region32: #{net_dgm_forward.1} parent=0 // pred_region
    _
  $region33: #{net_dgm_forward.1} parent=0 // pred_fallthru
    _
  // Predicated region
  $region34: #{net_dgm_forward.1} parent=0 // pred_check
    _
  $region35: #{net_dgm_forward.1} parent=0 // pred_check_branch
    %1379 = sbr.rel (0) target = $region37
  $region36: #{net_dgm_forward.1} parent=0 // pred_region
    _
  $region37: #{net_dgm_forward.1} parent=0 // pred_fallthru
    _

</llo_original>
